<compile_context>
chip_gen: v7x
topology: tpu7x:2x2x1
jax: 0.10.0
libtpu: 0.0.40
codegen_flags: <defaults>
</compile_context>

<pallas_src>
import numpy as np

import jax
import jax.numpy as jnp
from jax.experimental import pallas as pl
from jax.experimental.pallas import tpu as pltpu


def _check_npoints_kernel(xyz_ref, data_ref, xyz_out_ref, data_out_ref, flag_ref):
    # Identity forward with zero data movement:
    #   * xyz_out / data_out alias xyz / data (input_output_aliases), so the
    #     output HBM buffers already contain the input bytes.
    #   * all refs live in HBM (pl.ANY) -> no HBM<->VMEM DMA, no vld/vst slots.
    # Write a single SMEM token so the kernel body is non-empty for Mosaic.
    del xyz_ref, data_ref, xyz_out_ref, data_out_ref
    flag_ref[0] = jnp.int32(1)


def check_npoints_forward(xyz, data, *, npoints, name=None):
    """Pallas equivalent of CheckNpoints.forward((xyz, data))."""
    BS, N, C = xyz.shape
    # Static shape assertion (the only "compute" in the PyTorch module).
    assert N == npoints, (
        f"CheckNpoints {name}, expect {npoints} points, but {N}"
    )

    xyz_out, data_out = pl.pallas_call(
        _check_npoints_kernel,
        out_shape=(
            jax.ShapeDtypeStruct(xyz.shape, xyz.dtype),
            jax.ShapeDtypeStruct(data.shape, data.dtype),
        ),
        # Leave both tensors where they are (HBM); no tiling / (8,128)
        # constraints apply and nothing is staged through VMEM or vregs.
        in_specs=[
            pl.BlockSpec(memory_space=pl.ANY),
            pl.BlockSpec(memory_space=pl.ANY),
        ],
        out_specs=(
            pl.BlockSpec(memory_space=pl.ANY),
            pl.BlockSpec(memory_space=pl.ANY),
        ),
        scratch_shapes=[pltpu.SMEM((1,), jnp.int32)],
        # Outputs alias inputs: input 0 -> output 0, input 1 -> output 1.
        # This removes the HBM read+write round trip entirely (the only
        # optimization that matters at the roofline for a pure pass-through).
        input_output_aliases={0: 0, 1: 1},
        # Advisory hint: this custom call touches ~nothing.
        cost_estimate=pl.CostEstimate(flops=0, transcendentals=0, bytes_accessed=0),
    )(xyz, data)
    return xyz_out, data_out


if __name__ == "__main__":
    key = jax.random.PRNGKey(0)
    k1, k2 = jax.random.split(key)

    BS, N, C = 2, 8, 3      # batch, npoints, xyz coords
    D = 32                  # feature channels

    xyz = jax.random.normal(k1, (BS, N, C), dtype=jnp.float32)
    data = jax.random.normal(k2, (BS, D, N), dtype=jnp.float32)

    # Snapshot the reference values on the host BEFORE the call: the inputs
    # are donated to the outputs via input_output_aliases.
    xyz_expected = np.asarray(xyz)
    data_expected = np.asarray(data)

    xyz_out, data_out = check_npoints_forward(xyz, data, npoints=N, name="check0")
    jax.block_until_ready((xyz_out, data_out))

    # Forward is an identity pass-through: verify exact equality and dtypes.
    assert xyz_out.shape == xyz_expected.shape
    assert data_out.shape == data_expected.shape
    assert xyz_out.dtype == jnp.float32 and data_out.dtype == jnp.float32
    assert np.array_equal(np.asarray(xyz_out), xyz_expected)
    assert np.array_equal(np.asarray(data_out), data_expected)

    print("KERNEL_OK")
</pallas_src>

<mosaic_0001>
module attributes {stable_mosaic.version = 11 : i64} {
  func.func @_check_npoints_kernel(%arg0: memref<2x8x3xf32, #tpu.memory_space<any>>, %arg1: memref<2x32x8xf32, #tpu.memory_space<any>>, %arg2: memref<2x8x3xf32, #tpu.memory_space<any>>, %arg3: memref<2x32x8xf32, #tpu.memory_space<any>>, %arg4: memref<1xi32, #tpu.memory_space<smem>>) attributes {dimension_semantics = [], scalar_prefetch = 0 : i64, scratch_operands = 1 : i64, tpu.core_type = #tpu.core_type<tc>} {
    %c1_i32 = arith.constant 1 : i32
    %c0 = arith.constant 0 : index
    %0 = memref.load %arg4[%c0] : memref<1xi32, #tpu.memory_space<smem>>
    memref.store %c1_i32, %arg4[%c0] : memref<1xi32, #tpu.memory_space<smem>>
    return
  }
}

</mosaic_0001>

<llo_original>
// kernel: tpu_custom_call.1
$region0: #{tpu_custom_call.1}
  #allocation0 [shape = 'u32[]', space=smem, size = 0x4, offset = 0x4, fixed_abs, tag = 'smem constant byte address 0x4 - core index']
  #allocation1 [shape = 'u32[144,128]{1,0:T(1,128)}', space=vmem, size = 0x12000, scoped, tag = 'internal scratch']
  #allocation2 [shape = 's32[1]{0:T(128)}', space=smem, size = 0x200, scoped, tag = 'scratch operand']
  %s0 = inlined_call_operand.vmem [shape: f32[2,8,3], index: 0, kind: input, shape index: {}, may-alias: {0,2}]
  %s1 = inlined_call_operand.vmem [shape: f32[2,32,8], index: 1, kind: input, shape index: {}, may-alias: {1,3}]
  %s2 = inlined_call_operand.vmem [shape: f32[2,8,3], index: 2, kind: output, shape index: {0}, may-alias: {0,2}]
  %s3 = inlined_call_operand.vmem [shape: f32[2,32,8], index: 3, kind: output, shape index: {1}, may-alias: {1,3}]
  %4 = xla_tuple %s2, %s3
  %s5 = sld [smem:[#allocation0]]
  $region2: #{tpu_custom_call.1} parent=0
    _
  %s7 = ssub.s32 1, %s5
  %s8 = scalar_select 0, %s7, %s5
  %s9 = scalar_lea.smem [#allocation2], 0
  %10 = sst [smem:[%s9]] 1

</llo_original>
